<compile_context>
chip_gen: v5e
topology: v5e:2x2
jax: 0.10.0
libtpu: 0.0.40
codegen_flags: <defaults>
</compile_context>

<pallas_src>
import functools

import jax
import jax.numpy as jnp
from jax import lax
from jax.experimental import pallas as pl
from jax.experimental.pallas import tpu as pltpu


# ----------------------------------------------------------------------------
# Fused Pallas kernel: one graph per grid step -> packed [z_mean_norm | z_var]
# ----------------------------------------------------------------------------
def _mixture_kernel(w_shapes, latent_dim, adj_ref, x_ref, w_ref, out_ref):
    """Refs per grid step b (graph b):

    adj_ref : [1, N, N]            f32  normalized adjacency of graph b
    x_ref   : [1, N, F]            f32  node features of graph b
    w_ref   : [num_w, MR, MC]      f32  zero-padded stack of packed weights,
                                        VMEM-resident (constant index_map)
    out_ref : [1, N, latent_dim+1] f32  packed [z_mean_normalized | z_var]
    """
    A = adj_ref[0]                        # [N, N]
    h = x_ref[0]                          # [N, F]

    num_layers = len(w_shapes) - 1

    # All relations' GCN stacks at once: packed weights make each layer a
    # single wide (h @ W) followed by a single (A @ ...).  Dropout rate is 0
    # and bias=False, so the block-diagonal packing is mathematically exact.
    for l in range(num_layers):
        rows, cols = w_shapes[l]
        w = w_ref[l, :rows, :cols]        # static slice of the resident buffer
        hw = jnp.dot(h, w, preferred_element_type=jnp.float32)
        h = jnp.tanh(jnp.dot(A, hw, preferred_element_type=jnp.float32))

    # h is the lane-concatenation of the per-relation outputs, i.e. torch.cat(Z, 1).
    # Fused output projection: [z_mean | z_std_logit] in one matmul chain.
    rows, cols = w_shapes[num_layers]
    wout = w_ref[num_layers, :rows, :cols]
    zmzs = jnp.dot(A, jnp.dot(h, wout, preferred_element_type=jnp.float32),
                   preferred_element_type=jnp.float32)      # [N, latent_dim+1]

    # Masked full-width epilogue (pure VPU; no lane shifts / concatenation):
    #   lanes [0, latent_dim)  -> z_mean / (1e-4 + ||z_mean||)
    #   lane  [latent_dim]     -> softplus(z_std_logit) + 1
    lane = lax.broadcasted_iota(jnp.int32, zmzs.shape, dimension=1)
    is_mean = lane < latent_dim

    zm = jnp.where(is_mean, zmzs, 0.0)
    nrm = jnp.sqrt(jnp.sum(zm * zm, axis=-1, keepdims=True))
    zm_n = zm / (1e-4 + nrm)              # exact division: unit-norm mu for vMF

    # Stable softplus in f32.  (For |z| > 17 the log(1+exp(-|z|)) term is below
    # f32 eps relative to the +1 added next, so this matches the log1p form
    # bit-for-bit in the returned z_var.)
    sp = jnp.log(1.0 + jnp.exp(-jnp.abs(zmzs))) + jnp.maximum(zmzs, 0.0)

    out_ref[0] = jnp.where(is_mean, zm_n, sp + 1.0)


# ----------------------------------------------------------------------------
# Host-side weight packing (exact because dropout=0 and bias=False)
# ----------------------------------------------------------------------------
def _pack_weights(gcn_weights, w_mean, w_std):
    """Pack per-relation GCN weights + output projections into one padded stack.

    Returns (w_stack [num_w, MR, MC] f32, list of true (rows, cols) per slot).
    """
    num_relation = len(gcn_weights)
    num_layers = len(gcn_weights[0])
    mats = []
    # Layer 0: input x is shared across relations -> lane-concatenate.
    mats.append(jnp.concatenate(
        [gcn_weights[r][0] for r in range(num_relation)], axis=1))
    # Layers >= 1: block-diagonal, so [h_0|h_1|...] @ W_bd == [h_0@W_0 | h_1@W_1 | ...].
    for l in range(1, num_layers):
        mats.append(jax.scipy.linalg.block_diag(
            *[gcn_weights[r][l] for r in range(num_relation)]))
    # Output projection: [W_mean | W_std] fused -> [R*L_last, latent_dim + 1].
    mats.append(jnp.concatenate([w_mean, w_std], axis=1))

    shapes = [(int(m.shape[0]), int(m.shape[1])) for m in mats]
    mr = max(s[0] for s in shapes)
    mc = max(s[1] for s in shapes)
    padded = [jnp.pad(m, ((0, mr - m.shape[0]), (0, mc - m.shape[1])))
              for m in mats]
    return jnp.stack(padded, axis=0).astype(jnp.float32), shapes


# ----------------------------------------------------------------------------
# Wrapper
# ----------------------------------------------------------------------------
def mixture_of_sgcns_forward(adj, x, gcn_weights, w_mean, w_std):
    """Fused forward.  adj: [N,N] or [B,N,N]; x: [N,F] or [B,N,F]."""
    single = adj.ndim == 2
    if single:
        adj, x = adj[None], x[None]
    B, N, F_in = x.shape
    latent_dim = w_mean.shape[1]

    w_stack, w_shapes = _pack_weights(gcn_weights, w_mean, w_std)
    num_w, MR, MC = w_stack.shape

    kernel = functools.partial(_mixture_kernel, tuple(w_shapes), latent_dim)

    # Grid over graphs ("parallel"): amortizes per-call fixed overhead, lets
    # v7x's second TensorCore share the batch, and keeps the packed weights
    # VMEM-resident via a constant index_map.  Whole per-graph blocks fit VMEM
    # trivially at this size; no oversized vmem_limit request needed.
    #
    # TODO(synk): for large N (dense adj) this whole-graph block dies first on
    # v7x's 64 MiB VMEM -- switch to row-block tiling of adj ((TM, N) blocks,
    # "parallel" row axis, per-layer hidden slab resident), sizing TM so the
    # double-buffered bf16/f32 adj blocks stay in the 24-32 MiB budget on v7x
    # (~2x larger TM is fine on v5e/v6e's 128 MiB).
    packed_out = pl.pallas_call(
        kernel,
        out_shape=jax.ShapeDtypeStruct((B, N, latent_dim + 1), jnp.float32),
        grid=(B,),
        in_specs=[
            pl.BlockSpec((1, N, N), lambda b: (b, 0, 0)),
            pl.BlockSpec((1, N, F_in), lambda b: (b, 0, 0)),
            pl.BlockSpec((num_w, MR, MC), lambda b: (0, 0, 0)),
        ],
        out_specs=pl.BlockSpec((1, N, latent_dim + 1), lambda b: (b, 0, 0)),
        compiler_params=pltpu.CompilerParams(
            dimension_semantics=("parallel",)),
    )(adj.astype(jnp.float32), x.astype(jnp.float32), w_stack)

    z_mean = packed_out[..., :latent_dim]
    z_var = packed_out[..., latent_dim:]
    if single:
        z_mean, z_var = z_mean[0], z_var[0]
    return z_mean, z_var


# ----------------------------------------------------------------------------
# Pure-JAX reference (unfused, per-relation) for correctness checking
# ----------------------------------------------------------------------------
def reference_forward(adj, x, gcn_weights, w_mean, w_std):
    mm = functools.partial(jnp.matmul, precision=jax.lax.Precision.HIGHEST)
    Z = []
    for rel in gcn_weights:
        h = x
        for w in rel:
            h = jnp.tanh(mm(adj, mm(h, w)))
        Z.append(h)
    Zc = jnp.concatenate(Z, axis=-1)
    zm = mm(adj, mm(Zc, w_mean))
    zm = zm / (1e-4 + jnp.linalg.norm(zm, axis=-1, keepdims=True))
    zv = jax.nn.softplus(mm(adj, mm(Zc, w_std))) + 1.0
    return zm, zv


# ----------------------------------------------------------------------------
# VonMisesFisher reparameterized sample (plain-JAX glue around the kernel).
# ----------------------------------------------------------------------------
def vmf_rsample(key, mu, kappa, num_rounds=64):
    """mu: [M, m] unit directions, kappa: [M, 1] concentrations."""
    # TODO(synk): exact VonMisesFisher.rsample uses an unbounded rejection loop
    # (Wood's algorithm); here we use a fixed number of proposal rounds, which
    # matches the distribution but is not a bitwise reproduction of the torch op.
    M, m = mu.shape
    k = kappa[:, 0]
    k1, k2, k3 = jax.random.split(key, 3)

    sq = jnp.sqrt(4.0 * k ** 2 + (m - 1) ** 2)
    b = (-2.0 * k + sq) / (m - 1)
    a = (m - 1 + 2.0 * k + sq) / 4.0
    d = 4.0 * a * b / (1.0 + b) - (m - 1) * jnp.log(float(m - 1))

    eps = jax.random.beta(k1, (m - 1) / 2.0, (m - 1) / 2.0, shape=(num_rounds, M))
    u = jax.random.uniform(k2, shape=(num_rounds, M), minval=1e-8, maxval=1.0)
    w_prop = (1.0 - (1.0 + b) * eps) / (1.0 - (1.0 - b) * eps)
    t = 2.0 * a * b / (1.0 - (1.0 - b) * eps)
    accept = ((m - 1) * jnp.log(t) - t + d) >= jnp.log(u)
    first = jnp.argmax(accept, axis=0)          # first accepted proposal per node
    w = w_prop[first, jnp.arange(M)]
    w = jnp.where(jnp.any(accept, axis=0), w, w_prop[-1])

    # Uniform tangent direction orthogonal to e1.
    v = jax.random.normal(k3, shape=(M, m - 1))
    v = v / (jnp.linalg.norm(v, axis=-1, keepdims=True) + 1e-12)
    z = jnp.concatenate(
        [w[:, None], jnp.sqrt(jnp.clip(1.0 - w ** 2, 0.0))[:, None] * v], axis=-1)

    # Householder reflection mapping e1 -> mu.
    e1 = jnp.zeros_like(mu).at[:, 0].set(1.0)
    uvec = e1 - mu
    uvec = uvec / (jnp.linalg.norm(uvec, axis=-1, keepdims=True) + 1e-12)
    z = z - 2.0 * jnp.sum(z * uvec, axis=-1, keepdims=True) * uvec
    return z


# ----------------------------------------------------------------------------
# Driver
# ----------------------------------------------------------------------------
if __name__ == "__main__":
    key = jax.random.PRNGKey(0)

    # Small shapes consistent with the module, batched over B graphs.
    B = 4
    N = 16
    in_feature = 8
    layers = [16, 16]
    num_relation = 3
    latent_dim = 8

    k_adj, k_x, k_w, k_m, k_s, k_sample = jax.random.split(key, 6)

    # Batch of random symmetric adjacencies with self-loops, sym-normalized.
    a = (jax.random.uniform(k_adj, (B, N, N)) < 0.3).astype(jnp.float32)
    a = jnp.maximum(a, jnp.swapaxes(a, -1, -2)) + jnp.eye(N, dtype=jnp.float32)
    deg = jnp.sum(a, axis=-1)
    dinv = 1.0 / jnp.sqrt(deg)
    adj = dinv[..., :, None] * a * dinv[..., None, :]

    x = jax.random.normal(k_x, (B, N, in_feature), dtype=jnp.float32)

    # Deterministic parameter init (glorot-style scaling).
    dims = [in_feature] + layers
    gcn_weights = []
    wkeys = jax.random.split(k_w, num_relation * len(layers))
    wi = 0
    for r in range(num_relation):
        rel = []
        for li in range(len(layers)):
            fan_in, fan_out = dims[li], dims[li + 1]
            scale = jnp.sqrt(2.0 / (fan_in + fan_out))
            rel.append(scale * jax.random.normal(wkeys[wi], (fan_in, fan_out),
                                                 dtype=jnp.float32))
            wi += 1
        gcn_weights.append(rel)

    cat_dim = layers[-1] * num_relation
    w_mean = jnp.sqrt(2.0 / (cat_dim + latent_dim)) * jax.random.normal(
        k_m, (cat_dim, latent_dim), dtype=jnp.float32)
    w_std = jnp.sqrt(2.0 / (cat_dim + 1)) * jax.random.normal(
        k_s, (cat_dim, 1), dtype=jnp.float32)

    # Fused Pallas kernel for the deterministic part of the forward pass.
    z_mean, z_var = mixture_of_sgcns_forward(adj, x, gcn_weights, w_mean, w_std)

    # Pure-JAX reference check.
    zm_ref, zv_ref = reference_forward(adj, x, gcn_weights, w_mean, w_std)

    # Reparameterize: z ~ vMF(z_mean, z_var), per node (flatten the batch).
    z = vmf_rsample(k_sample,
                    z_mean.reshape(B * N, latent_dim),
                    z_var.reshape(B * N, 1)).reshape(B, N, latent_dim)

    z, z_mean, z_var = jax.block_until_ready((z, z_mean, z_var))

    assert z.shape == (B, N, latent_dim)
    assert z_mean.shape == (B, N, latent_dim)
    assert z_var.shape == (B, N, 1)
    assert bool(jnp.all(jnp.isfinite(z)))
    assert bool(jnp.all(jnp.isfinite(z_mean)))
    assert bool(jnp.all(z_var >= 1.0))
    assert bool(jnp.allclose(z_mean, zm_ref, atol=3e-2, rtol=3e-2))
    assert bool(jnp.allclose(z_var, zv_ref, atol=3e-2, rtol=3e-2))

    print("KERNEL_OK")
</pallas_src>

<mosaic_0001>
module attributes {stable_mosaic.version = 11 : i64} {
  func.func @_mixture_kernel(%arg0: i32, %arg1: memref<1x16x16xf32, #tpu.memory_space<vmem>>, %arg2: memref<1x16x8xf32, #tpu.memory_space<vmem>>, %arg3: memref<3x48x48xf32, #tpu.memory_space<vmem>>, %arg4: memref<1x16x9xf32, #tpu.memory_space<vmem>>) attributes {dimension_semantics = [#tpu.dimension_semantics<parallel>], iteration_bounds = array<i64: 4>, scalar_prefetch = 0 : i64, scratch_operands = 0 : i64, tpu.core_type = #tpu.core_type<tc>, window_params = [{transform_indices = @transform_0, window_bounds = array<i64: 1, 16, 16>}, {transform_indices = @transform_1, window_bounds = array<i64: 1, 16, 8>}, {pipeline_mode = #tpu.pipeline_mode<synchronous>, transform_indices = @transform_2, window_bounds = array<i64: 3, 48, 48>}, {transform_indices = @transform_3, window_bounds = array<i64: 1, 16, 9>}]} {
    %c0 = arith.constant 0 : index
    %c0_0 = arith.constant 0 : index
    %c0_1 = arith.constant 0 : index
    %0 = vector.load %arg1[%c0, %c0_0, %c0_1] : memref<1x16x16xf32, #tpu.memory_space<vmem>>, vector<1x16x16xf32>
    %1 = vector.shape_cast %0 : vector<1x16x16xf32> to vector<16x16xf32>
    %c0_2 = arith.constant 0 : index
    %c0_3 = arith.constant 0 : index
    %c0_4 = arith.constant 0 : index
    %2 = vector.load %arg2[%c0_2, %c0_3, %c0_4] : memref<1x16x8xf32, #tpu.memory_space<vmem>>, vector<1x16x8xf32>
    %3 = vector.shape_cast %2 : vector<1x16x8xf32> to vector<16x8xf32>
    %c0_5 = arith.constant 0 : index
    %c0_6 = arith.constant 0 : index
    %c0_7 = arith.constant 0 : index
    %4 = vector.load %arg3[%c0_5, %c0_6, %c0_7] : memref<3x48x48xf32, #tpu.memory_space<vmem>>, vector<1x8x48xf32>
    %5 = vector.shape_cast %4 : vector<1x8x48xf32> to vector<8x48xf32>
    %cst = arith.constant dense<0.000000e+00> : vector<16x48xf32>
    %6 = tpu.matmul %3, %5, %cst {dimension_numbers = #tpu.dot_dimension_numbers<[1], [0], [0], [1], [0, 0, 1, 1], [], []>} : vector<16x8xf32>, vector<8x48xf32>, vector<16x48xf32> -> vector<16x48xf32>
    %cst_8 = arith.constant dense<0.000000e+00> : vector<16x48xf32>
    %7 = tpu.matmul %1, %6, %cst_8 {dimension_numbers = #tpu.dot_dimension_numbers<[1], [0], [0], [1], [0, 0, 1, 1], [], []>} : vector<16x16xf32>, vector<16x48xf32>, vector<16x48xf32> -> vector<16x48xf32>
    %8 = math.tanh %7 : vector<16x48xf32>
    %c1 = arith.constant 1 : index
    %c0_9 = arith.constant 0 : index
    %c0_10 = arith.constant 0 : index
    %9 = vector.load %arg3[%c1, %c0_9, %c0_10] : memref<3x48x48xf32, #tpu.memory_space<vmem>>, vector<1x48x48xf32>
    %10 = vector.shape_cast %9 : vector<1x48x48xf32> to vector<48x48xf32>
    %cst_11 = arith.constant dense<0.000000e+00> : vector<16x48xf32>
    %11 = tpu.matmul %8, %10, %cst_11 {dimension_numbers = #tpu.dot_dimension_numbers<[1], [0], [0], [1], [0, 0, 1, 1], [], []>} : vector<16x48xf32>, vector<48x48xf32>, vector<16x48xf32> -> vector<16x48xf32>
    %cst_12 = arith.constant dense<0.000000e+00> : vector<16x48xf32>
    %12 = tpu.matmul %1, %11, %cst_12 {dimension_numbers = #tpu.dot_dimension_numbers<[1], [0], [0], [1], [0, 0, 1, 1], [], []>} : vector<16x16xf32>, vector<16x48xf32>, vector<16x48xf32> -> vector<16x48xf32>
    %13 = math.tanh %12 : vector<16x48xf32>
    %c2 = arith.constant 2 : index
    %c0_13 = arith.constant 0 : index
    %c0_14 = arith.constant 0 : index
    %14 = vector.load %arg3[%c2, %c0_13, %c0_14] : memref<3x48x48xf32, #tpu.memory_space<vmem>>, vector<1x48x9xf32>
    %15 = vector.shape_cast %14 : vector<1x48x9xf32> to vector<48x9xf32>
    %cst_15 = arith.constant dense<0.000000e+00> : vector<16x9xf32>
    %16 = tpu.matmul %13, %15, %cst_15 {dimension_numbers = #tpu.dot_dimension_numbers<[1], [0], [0], [1], [0, 0, 1, 1], [], []>} : vector<16x48xf32>, vector<48x9xf32>, vector<16x9xf32> -> vector<16x9xf32>
    %cst_16 = arith.constant dense<0.000000e+00> : vector<16x9xf32>
    %17 = tpu.matmul %1, %16, %cst_16 {dimension_numbers = #tpu.dot_dimension_numbers<[1], [0], [0], [1], [0, 0, 1, 1], [], []>} : vector<16x16xf32>, vector<16x9xf32>, vector<16x9xf32> -> vector<16x9xf32>
    %18 = tpu.iota {dimensions = array<i32: 1>} : vector<16x9xi32>
    %c8_i32 = arith.constant 8 : i32
    %19 = vector.broadcast %c8_i32 : i32 to vector<16x9xi32>
    %20 = arith.cmpi slt, %18, %19 : vector<16x9xi32>
    %cst_17 = arith.constant 0.000000e+00 : f32
    %21 = vector.broadcast %cst_17 : f32 to vector<16x9xf32>
    %22 = arith.select %20, %17, %21 : vector<16x9xi1>, vector<16x9xf32>
    %23 = arith.mulf %22, %22 : vector<16x9xf32>
    %cst_18 = arith.constant dense<0.000000e+00> : vector<16xf32>
    %24 = vector.multi_reduction <add>, %23, %cst_18 [1] : vector<16x9xf32> to vector<16xf32>
    %25 = vector.shape_cast %24 : vector<16xf32> to vector<16x1xf32>
    %26 = math.sqrt %25 : vector<16x1xf32>
    %cst_19 = arith.constant 9.99999974E-5 : f32
    %27 = vector.broadcast %cst_19 : f32 to vector<16x1xf32>
    %28 = arith.addf %27, %26 : vector<16x1xf32>
    %29 = vector.broadcast %28 : vector<16x1xf32> to vector<16x9xf32>
    %30 = arith.divf %22, %29 : vector<16x9xf32>
    %31 = math.absf %17 : vector<16x9xf32>
    %cst_20 = arith.constant 0.000000e+00 : f32
    %32 = vector.broadcast %cst_20 : f32 to vector<16x9xf32>
    %33 = arith.subf %32, %31 : vector<16x9xf32>
    %34 = math.exp %33 : vector<16x9xf32>
    %cst_21 = arith.constant 1.000000e+00 : f32
    %35 = vector.broadcast %cst_21 : f32 to vector<16x9xf32>
    %36 = arith.addf %35, %34 : vector<16x9xf32>
    %37 = math.log %36 : vector<16x9xf32>
    %cst_22 = arith.constant 0.000000e+00 : f32
    %38 = vector.broadcast %cst_22 : f32 to vector<16x9xf32>
    %39 = arith.maximumf %17, %38 : vector<16x9xf32>
    %40 = arith.addf %37, %39 : vector<16x9xf32>
    %cst_23 = arith.constant 1.000000e+00 : f32
    %41 = vector.broadcast %cst_23 : f32 to vector<16x9xf32>
    %42 = arith.addf %40, %41 : vector<16x9xf32>
    %43 = arith.select %20, %30, %42 : vector<16x9xi1>, vector<16x9xf32>
    %c0_24 = arith.constant 0 : index
    %c0_25 = arith.constant 0 : index
    %c0_26 = arith.constant 0 : index
    %44 = vector.load %arg4[%c0_24, %c0_25, %c0_26] : memref<1x16x9xf32, #tpu.memory_space<vmem>>, vector<1x16x9xf32>
    %45 = vector.shape_cast %44 : vector<1x16x9xf32> to vector<16x9xf32>
    %46 = vector.shape_cast %43 : vector<16x9xf32> to vector<1x16x9xf32>
    tpu.vector_store %arg4[%c0_24, %c0_25, %c0_26], %46 {strides = array<i32>} : memref<1x16x9xf32, #tpu.memory_space<vmem>>, vector<1x16x9xf32>,
    return
  }
  func.func @transform_0(%arg0: i32) -> (i32, i32, i32) {
    %c0_i32 = arith.constant 0 : i32
    %c0_i32_0 = arith.constant 0 : i32
    %c0_i32_1 = arith.constant 0 : i32
    return %arg0, %c0_i32, %c0_i32_0 : i32, i32, i32
  }
  func.func @transform_1(%arg0: i32) -> (i32, i32, i32) {
    %c0_i32 = arith.constant 0 : i32
    %c0_i32_0 = arith.constant 0 : i32
    %c0_i32_1 = arith.constant 0 : i32
    return %arg0, %c0_i32, %c0_i32_0 : i32, i32, i32
  }
  func.func @transform_2(%arg0: i32) -> (i32, i32, i32) {
    %c0_i32 = arith.constant 0 : i32
    %c0_i32_0 = arith.constant 0 : i32
    %c0_i32_1 = arith.constant 0 : i32
    %c0_i32_2 = arith.constant 0 : i32
    return %c0_i32, %c0_i32_0, %c0_i32_1 : i32, i32, i32
  }
  func.func @transform_3(%arg0: i32) -> (i32, i32, i32) {
    %c0_i32 = arith.constant 0 : i32
    %c0_i32_0 = arith.constant 0 : i32
    %c0_i32_1 = arith.constant 0 : i32
    return %arg0, %c0_i32, %c0_i32_0 : i32, i32, i32
  }
}

</mosaic_0001>

<llo_original>
// kernel: tpu_custom_call.1
$region0: #{tpu_custom_call.1}
  #allocation0 [shape = 'u32[]', space=smem, size = 0x4, offset = 0x4, fixed_abs, tag = 'smem constant byte address 0x4 - core index']
  #allocation1 [shape = 'u32[72,128]{1,0:T(1,128)}', space=vmem, size = 0x9000, scoped, tag = 'internal scratch']
  %s0 = inlined_call_operand.vmem [shape: f32[4,16,16], index: 0, kind: input, shape index: {}]
  %s1 = inlined_call_operand.vmem [shape: f32[4,16,8], index: 1, kind: input, shape index: {}]
  %s2 = inlined_call_operand.hbm [shape: f32[3,48,48], index: 2, kind: input, shape index: {}]
  %s3 = inlined_call_operand.vmem [shape: f32[4,16,9], index: 3, kind: output, shape index: {}]
  %s4 = sld [smem:[#allocation0]]
  $region49: #{tpu_custom_call.1} parent=0
    _
  %s6 = ssub.s32 1, %s4
  %s7 = scalar_select 0, %s6, %s4
  $region1: #{tpu_custom_call.1} parent=0
    #allocation2 [shape = 'u8[73728]{0}', space=vmem, size = 0x12000, scoped, tag = 'input window, operand 2, single buffered']
    #allocation3 [shape = 's32[2]{0}', space=sflag, size = 0x8, scoped, tag = 'scoped memory for tpu_custom_call.1']
    %8 = vsyncpa [#allocation3], 0
    loop: start=0, step=1, limit=6
    $region2: #{tpu_custom_call.1} parent=1 // loop_pre_header
      _
    $region3: #{tpu_custom_call.1} parent=1 // loop_header
      %s10 = sphi 0, %s14
      %p11 = scmp.ge.s32.totalorder %s10, 6
      %s20 = sphi 0, %s22
      %s23 = sphi 0, %s20
      %s24 = sphi 0, %s23
      %s40 = sphi 0, %s24
      %s46 = sphi 0, %s48
      %s49 = sphi 0, %s46
      %s50 = sphi 0, %s49
      %s66 = sphi 0, %s50
      %s70 = sphi 0, %s70
      %s72 = sphi 0, %s70
      %s73 = sphi 0, %s72
      %s87 = sphi 0, %s73
      %s93 = sphi 0, %s95
      %s96 = sphi 0, %s93
      %s97 = sphi 0, %s96
      %s113 = sphi 0, %s97
    $region4: #{tpu_custom_call.1} parent=1 // loop_header_branch
      %13 = sbr.rel (%p11) target = $region8
    $region5: #{tpu_custom_call.1} parent=1 // loop_body
      %s15 = ssub.s32 %s10, 1
      %s16 = ssub.s32 %s10, 2
      %s17 = sadd.s32 %s10, 1
      %s18 = ssub.s32 %s10, %s17
      %p19 = scmp.eq.s32.totalorder %s18, 0
      %s21 = sadd.s32 %s20, 1
      %s22 = scalar_select %p19, %s20, %s21
      %p25 = pneg %p19
      %p26 = scmp.eq.s32.totalorder %s10, 3
      %p27 = por %p25, %p26
      %p28 = scmp.ne.s32.totalorder %s20, %s23
      %p29 = scmp.eq.s32.totalorder %s10, 0
      %p30 = por %p28, %p29
      %p31 = scmp.ne.s32.totalorder %s20, %s23
      %p32 = scmp.eq.s32.totalorder %s15, 3
      %p33 = por %p31, %p32
      %p34 = scmp.ne.s32.totalorder %s23, %s24
      %p35 = scmp.eq.s32.totalorder %s15, 0
      %p36 = por %p34, %p35
      %p37 = scmp.ne.s32.totalorder %s23, %s24
      %p38 = scmp.eq.s32.totalorder %s16, 3
      %p39 = por %p37, %p38
      %p41 = scmp.ne.s32.totalorder %s24, %s40
      %p42 = scmp.eq.s32.totalorder %s16, 0
      %p43 = por %p41, %p42
      %s44 = ssub.s32 %s10, %s17
      %p45 = scmp.eq.s32.totalorder %s44, 0
      %s47 = sadd.s32 %s46, 1
      %s48 = scalar_select %p45, %s46, %s47
      %p51 = pneg %p45
      %p52 = scmp.eq.s32.totalorder %s10, 3
      %p53 = por %p51, %p52
      %p54 = scmp.ne.s32.totalorder %s46, %s49
      %p55 = scmp.eq.s32.totalorder %s10, 0
      %p56 = por %p54, %p55
      %p57 = scmp.ne.s32.totalorder %s46, %s49
      %p58 = scmp.eq.s32.totalorder %s15, 3
      %p59 = por %p57, %p58
      %p60 = scmp.ne.s32.totalorder %s49, %s50
      %p61 = scmp.eq.s32.totalorder %s15, 0
      %p62 = por %p60, %p61
      %p63 = scmp.ne.s32.totalorder %s49, %s50
      %p64 = scmp.eq.s32.totalorder %s16, 3
      %p65 = por %p63, %p64
      %p67 = scmp.ne.s32.totalorder %s50, %s66
      %p68 = scmp.eq.s32.totalorder %s16, 0
      %p69 = por %p67, %p68
      %s71 = sadd.s32 %s70, 1
      %p74 = scmp.eq.s32.totalorder %s10, 3
      %p75 = scmp.ne.s32.totalorder %s70, %s72
      %p76 = scmp.eq.s32.totalorder %s10, 0
      %p77 = por %p75, %p76
      %p78 = scmp.ne.s32.totalorder %s70, %s72
      %p79 = scmp.eq.s32.totalorder %s15, 3
      %p80 = por %p78, %p79
      %p81 = scmp.ne.s32.totalorder %s72, %s73
      %p82 = scmp.eq.s32.totalorder %s15, 0
      %p83 = por %p81, %p82
      %p84 = scmp.ne.s32.totalorder %s72, %s73
      %p85 = scmp.eq.s32.totalorder %s16, 3
      %p86 = por %p84, %p85
      %p88 = scmp.ne.s32.totalorder %s73, %s87
      %p89 = scmp.eq.s32.totalorder %s16, 0
      %p90 = por %p88, %p89
      %s91 = ssub.s32 %s10, %s17
      %p92 = scmp.eq.s32.totalorder %s91, 0
      %s94 = sadd.s32 %s93, 1
      %s95 = scalar_select %p92, %s93, %s94
      %p98 = pneg %p92
      %p99 = scmp.eq.s32.totalorder %s10, 3
      %p100 = por %p98, %p99
      %p101 = scmp.ne.s32.totalorder %s93, %s96
      %p102 = scmp.eq.s32.totalorder %s10, 0
      %p103 = por %p101, %p102
      %p104 = scmp.ne.s32.totalorder %s93, %s96
      %p105 = scmp.eq.s32.totalorder %s15, 3
      %p106 = por %p104, %p105
      %p107 = scmp.ne.s32.totalorder %s96, %s97
      %p108 = scmp.eq.s32.totalorder %s15, 0
      %p109 = por %p107, %p108
      %p110 = scmp.ne.s32.totalorder %s96, %s97
      %p111 = scmp.eq.s32.totalorder %s16, 3
      %p112 = por %p110, %p111
      %p114 = scmp.ne.s32.totalorder %s97, %s113
      %p115 = scmp.eq.s32.totalorder %s16, 0
      %p116 = por %p114, %p115
      %p117 = scmp.le.s32.totalorder 1, %s10
      %p118 = scmp.lt.s32.totalorder %s10, 5
      %p119 = pnand %p117, %p118
      %p120 = pneg %p119
      // Predicated region
      $region9: #{tpu_custom_call.1} parent=5 // pred_check
        _
      $region10: #{tpu_custom_call.1} parent=5 // pred_check_branch
        %122 = sbr.rel (%p119) target = $region12
      $region11: #{tpu_custom_call.1} parent=5 // pred_region
        %s123 = ssub.s32 %s10, 1
        // Predicated region
        $region13: #{tpu_custom_call.1} parent=11 // pred_check
          %p124 = pneg %p83
        $region14: #{tpu_custom_call.1} parent=11 // pred_check_branch
          %126 = sbr.rel (%p124) target = $region16
        $region15: #{tpu_custom_call.1} parent=11 // pred_region
          %128 = vsyncadd [#allocation3], 0
          %s129 = sshll.u32 %s2, 4
          %s130 = int_to_ptr.hbm [resolvable:$true] %s129
          %s131 = sshll.u32 [#allocation2], 4
          %s132 = int_to_ptr.vmem [resolvable:$true] %s131
          %137 = dma.hbm_to_vmem [thread:$0]  %s130, 2304, %s132, [#allocation3], 128, 128, 8
        $region16: #{tpu_custom_call.1} parent=11 // pred_fallthru
          _
      $region12: #{tpu_custom_call.1} parent=5 // pred_fallthru
        _
      %p138 = scmp.lt.s32.totalorder %s10, 4
      // Predicated region
      $region17: #{tpu_custom_call.1} parent=5 // pred_check
        %p139 = pneg %p138
      $region18: #{tpu_custom_call.1} parent=5 // pred_check_branch
        %141 = sbr.rel (%p139) target = $region20
      $region19: #{tpu_custom_call.1} parent=5 // pred_region
        // Predicated region
        $region21: #{tpu_custom_call.1} parent=19 // pred_check
          %p142 = pneg %p30
        $region22: #{tpu_custom_call.1} parent=19 // pred_check_branch
          %144 = sbr.rel (%p142) target = $region24
        $region23: #{tpu_custom_call.1} parent=19 // pred_region
          %p145 = scmp.lt.s32.totalorder %s10, 3
          %s146 = scalar_select %p145, %s10, 3
          %s147 = smul.addr %s146, 2
          %s148 = smul.addr %s147, 8
          %s149 = scalar_lea.vmem %s0, %s148
        $region24: #{tpu_custom_call.1} parent=19 // pred_fallthru
          _
        // Predicated region
        $region25: #{tpu_custom_call.1} parent=19 // pred_check
          %p150 = pneg %p56
        $region26: #{tpu_custom_call.1} parent=19 // pred_check_branch
          %152 = sbr.rel (%p150) target = $region28
        $region27: #{tpu_custom_call.1} parent=19 // pred_region
          %p153 = scmp.lt.s32.totalorder %s10, 3
          %s154 = scalar_select %p153, %s10, 3
          %s155 = smul.addr %s154, 2
          %s156 = smul.addr %s155, 8
          %s157 = scalar_lea.vmem %s1, %s156
        $region28: #{tpu_custom_call.1} parent=19 // pred_fallthru
          _
      $region20: #{tpu_custom_call.1} parent=5 // pred_fallthru
        _
      %p158 = scmp.le.s32.totalorder 1, %s10
      %p159 = scmp.lt.s32.totalorder %s10, 5
      %p160 = pnand %p158, %p159
      %p161 = pneg %p160
      // Predicated region
      $region29: #{tpu_custom_call.1} parent=5 // pred_check
        _
      $region30: #{tpu_custom_call.1} parent=5 // pred_check_branch
        %163 = sbr.rel (%p160) target = $region32
      $region31: #{tpu_custom_call.1} parent=5 // pred_region
        %s164 = ssub.s32 %s10, 1
        // Predicated region
        $region33: #{tpu_custom_call.1} parent=31 // pred_check
          %p165 = pneg %p83
        $region34: #{tpu_custom_call.1} parent=31 // pred_check_branch
          %167 = sbr.rel (%p165) target = $region36
        $region35: #{tpu_custom_call.1} parent=31 // pred_region
          %169 = dma.done [#allocation3], 2304
        $region36: #{tpu_custom_call.1} parent=31 // pred_fallthru
          _
        %p170 = scmp.lt.s32.totalorder %s15, 3
        %s171 = scalar_select %p170, %s15, 3
        %s172 = smul.addr %s171, 2
        %s173 = smul.addr %s172, 8
        %s174 = scalar_lea.vmem %s0, %s173
        %p175 = pneg %p36
        %p176 = pneg %p33
        %p177 = scmp.lt.s32.totalorder %s15, 3
        %s178 = scalar_select %p177, %s15, 3
        %s179 = smul.addr %s178, 2
        %s180 = smul.addr %s179, 8
        %s181 = scalar_lea.vmem %s1, %s180
        %p182 = pneg %p62
        %p183 = pneg %p59
        %p184 = pneg %p83
        %p185 = pneg %p80
        %p186 = pneg %p109
        %p187 = pneg %p106
        %p188 = scmp.lt.s32.totalorder %s15, 3
        %s189 = scalar_select %p188, %s15, 3
        %s190 = smul.addr %s189, 2
        %s191 = smul.addr %s190, 8
        %s192 = scalar_lea.vmem %s3, %s191
        %p193 = scmp.lt.s32.totalorder %s15, 3
        %s194 = scalar_select %p193, %s15, 3
        %s195 = smul.addr %s194, 2
        %s196 = smul.addr %s195, 8
        %s197 = scalar_lea.vmem %s0, %s196
        %p198 = scmp.lt.s32.totalorder %s15, 3
        %s199 = scalar_select %p198, %s15, 3
        %s200 = smul.addr %s199, 2
        %s201 = smul.addr %s200, 8
        %s202 = scalar_lea.vmem %s1, %s201
        %p203 = scmp.lt.s32.totalorder %s15, 3
        %s204 = scalar_select %p203, %s15, 3
        %s205 = smul.addr %s204, 2
        %s206 = smul.addr %s205, 8
        %s207 = scalar_lea.vmem %s3, %s206
        %v208 = vld [vmem:[%s197] sm:$0xff]
        %v209 = vld [vmem:[%s197 + $0x8] sm:$0xff]
        %v210 = vld [vmem:[%s202] sm:$0xff]
        %v211 = vld [vmem:[%s202 + $0x8] sm:$0xff]
        %v212 = vld [vmem:[#allocation2] sm:$0xff]
        %vm213 = vcmask 64512
        %v215 = vsel %vm213, %v210, 0
        %v218 = vsel %vm213, %v211, 0
        %220 = vmatpush.msra.mxu0 0.0
        %221 = vmatpush.msra.mxu0 0.0
        %222 = vmatpush.msra.mxu0 0.0
        %223 = vmatpush.msra.mxu0 0.0
        %224 = vmatpush.msra.mxu0 0.0
        %225 = vmatpush.msra.mxu0 0.0
        %226 = vmatpush.msra.mxu0 0.0
        %227 = vmatpush.msra.mxu0 0.0
        %228 = vmatpush.msra.mxu0 0.0
        %229 = vmatpush.msra.mxu0 0.0
        %230 = vmatpush.msra.mxu0 0.0
        %231 = vmatpush.msra.mxu0 0.0
        %232 = vmatpush.msra.mxu0 0.0
        %233 = vmatpush.msra.mxu0 0.0
        %234 = vmatpush.msra.mxu0 0.0
        %235 = vmatpush.msra.mxu0 %v212
        %236 = vmatmul.f32.gmra.mxu0 %v215
        %v237 = vpop.f32.mrf.mxu0
        %v238 = vadd.f32 0.0, %v237
        %239 = vmatmul.f32.gmra.mxu0 %v218
        %v240 = vpop.f32.mrf.mxu0
        %v241 = vadd.f32 0.0, %v240
        %242 = vdwg.mxu0
        %vm243 = vcmask 130048
        %v245 = vsel %vm243, %v208, 0
        %v248 = vsel %vm243, %v209, 0
        %250 = vmatpush.msra.mxu0 0.0
        %251 = vmatpush.msra.mxu0 0.0
        %252 = vmatpush.msra.mxu0 0.0
        %253 = vmatpush.msra.mxu0 0.0
        %254 = vmatpush.msra.mxu0 0.0
        %255 = vmatpush.msra.mxu0 0.0
        %256 = vmatpush.msra.mxu0 0.0
        %257 = vmatpush.msra.mxu0 0.0
        %258 = vmatpush.msra.mxu0 0.0
        %259 = vmatpush.msra.mxu0 0.0
        %260 = vmatpush.msra.mxu0 0.0
        %261 = vmatpush.msra.mxu0 0.0
        %262 = vmatpush.msra.mxu0 0.0
        %263 = vmatpush.msra.mxu0 0.0
        %264 = vmatpush.msra.mxu0 %v241
        %265 = vmatpush.msra.mxu0 %v238
        %266 = vmatmul.f32.gmra.mxu0 %v245
        %v267 = vpop.f32.mrf.mxu0
        %v268 = vadd.f32 0.0, %v267
        %269 = vmatmul.f32.gmra.mxu0 %v248
        %v270 = vpop.f32.mrf.mxu0
        %v271 = vadd.f32 0.0, %v270
        %272 = vdwg.mxu0
        %v273 = vtanh.pop %v268
        %v274 = vtanh.pop %v271
        %s275 = scalar_lea.vmem [#allocation2], 48
        %v276 = vld [vmem:[%s275] sm:$0xff]
        %v277 = vld [vmem:[%s275 + $0x8] sm:$0xff]
        %v278 = vld [vmem:[%s275 + $0x10] sm:$0xff]
        %v279 = vld [vmem:[%s275 + $0x18] sm:$0xff]
        %v280 = vld [vmem:[%s275 + $0x20] sm:$0xff]
        %v281 = vld [vmem:[%s275 + $0x28] sm:$0xff]
        %vm282 = vcmask 392192
        %v284 = vsel %vm282, %v273, 0
        %v287 = vsel %vm282, %v274, 0
        %289 = vmatpush.msra.mxu0 0.0
        %290 = vmatpush.msra.mxu0 0.0
        %291 = vmatpush.msra.mxu0 0.0
        %292 = vmatpush.msra.mxu0 0.0
        %293 = vmatpush.msra.mxu0 0.0
        %294 = vmatpush.msra.mxu0 0.0
        %295 = vmatpush.msra.mxu0 0.0
        %296 = vmatpush.msra.mxu0 0.0
        %297 = vmatpush.msra.mxu0 0.0
        %298 = vmatpush.msra.mxu0 0.0
        %299 = vmatpush.msra.mxu0 %v281
        %300 = vmatpush.msra.mxu0 %v280
        %301 = vmatpush.msra.mxu0 %v279
        %302 = vmatpush.msra.mxu0 %v278
        %303 = vmatpush.msra.mxu0 %v277
        %304 = vmatpush.msra.mxu0 %v276
        %305 = vmatmul.f32.gmra.mxu0 %v284
        %v306 = vpop.f32.mrf.mxu0
        %v307 = vadd.f32 0.0, %v306
        %308 = vmatmul.f32.gmra.mxu0 %v287
        %v309 = vpop.f32.mrf.mxu0
        %v310 = vadd.f32 0.0, %v309
        %311 = vdwg.mxu0
        %312 = vmatpush.msra.mxu0 0.0
        %313 = vmatpush.msra.mxu0 0.0
        %314 = vmatpush.msra.mxu0 0.0
        %315 = vmatpush.msra.mxu0 0.0
        %316 = vmatpush.msra.mxu0 0.0
        %317 = vmatpush.msra.mxu0 0.0
        %318 = vmatpush.msra.mxu0 0.0
        %319 = vmatpush.msra.mxu0 0.0
        %320 = vmatpush.msra.mxu0 0.0
        %321 = vmatpush.msra.mxu0 0.0
        %322 = vmatpush.msra.mxu0 0.0
        %323 = vmatpush.msra.mxu0 0.0
        %324 = vmatpush.msra.mxu0 0.0
        %325 = vmatpush.msra.mxu0 0.0
        %326 = vmatpush.msra.mxu0 %v310
        %327 = vmatpush.msra.mxu0 %v307
        %328 = vmatmul.f32.gmra.mxu0 %v245
        %v329 = vpop.f32.mrf.mxu0
        %v330 = vadd.f32 0.0, %v329
        %331 = vmatmul.f32.gmra.mxu0 %v248
        %v332 = vpop.f32.mrf.mxu0
        %v333 = vadd.f32 0.0, %v332
        %334 = vdwg.mxu0
        %v335 = vtanh.pop %v330
        %v336 = vtanh.pop %v333
        %s337 = scalar_lea.vmem [#allocation2], 96
        %v338 = vld [vmem:[%s337] sm:$0xff]
        %v339 = vld [vmem:[%s337 + $0x8] sm:$0xff]
        %v340 = vld [vmem:[%s337 + $0x10] sm:$0xff]
        %v341 = vld [vmem:[%s337 + $0x18] sm:$0xff]
        %v342 = vld [vmem:[%s337 + $0x20] sm:$0xff]
        %v343 = vld [vmem:[%s337 + $0x28] sm:$0xff]
        %v345 = vsel %vm282, %v335, 0
        %v348 = vsel %vm282, %v336, 0
        %350 = vmatpush.msra.mxu0 0.0
        %351 = vmatpush.msra.mxu0 0.0
        %352 = vmatpush.msra.mxu0 0.0
        %353 = vmatpush.msra.mxu0 0.0
        %354 = vmatpush.msra.mxu0 0.0
        %355 = vmatpush.msra.mxu0 0.0
        %356 = vmatpush.msra.mxu0 0.0
        %357 = vmatpush.msra.mxu0 0.0
        %358 = vmatpush.msra.mxu0 0.0
        %359 = vmatpush.msra.mxu0 0.0
        %360 = vmatpush.msra.mxu0 %v343
        %361 = vmatpush.msra.mxu0 %v342
        %362 = vmatpush.msra.mxu0 %v341
        %363 = vmatpush.msra.mxu0 %v340
        %364 = vmatpush.msra.mxu0 %v339
        %365 = vmatpush.msra.mxu0 %v338
        %366 = vmatmul.f32.gmra.mxu0 %v345
        %v367 = vpop.f32.mrf.mxu0
        %v368 = vadd.f32 0.0, %v367
        %369 = vmatmul.f32.gmra.mxu0 %v348
        %v370 = vpop.f32.mrf.mxu0
        %v371 = vadd.f32 0.0, %v370
        %372 = vdwg.mxu0
        %373 = vmatpush.msra.mxu0 0.0
        %374 = vmatpush.msra.mxu0 0.0
        %375 = vmatpush.msra.mxu0 0.0
        %376 = vmatpush.msra.mxu0 0.0
        %377 = vmatpush.msra.mxu0 0.0
        %378 = vmatpush.msra.mxu0 0.0
        %379 = vmatpush.msra.mxu0 0.0
        %380 = vmatpush.msra.mxu0 0.0
        %381 = vmatpush.msra.mxu0 0.0
        %382 = vmatpush.msra.mxu0 0.0
        %383 = vmatpush.msra.mxu0 0.0
        %384 = vmatpush.msra.mxu0 0.0
        %385 = vmatpush.msra.mxu0 0.0
        %386 = vmatpush.msra.mxu0 0.0
        %387 = vmatpush.msra.mxu0 %v371
        %388 = vmatpush.msra.mxu0 %v368
        %389 = vmatmul.f32.gmra.mxu0 %v245
        %v390 = vpop.f32.mrf.mxu0
        %v391 = vadd.f32 0.0, %v390
        %392 = vmatmul.f32.gmra.mxu0 %v248
        %v393 = vpop.f32.mrf.mxu0
        %v394 = vadd.f32 0.0, %v393
        %395 = vdwg.mxu0
        %v396 = vlaneseq
        %v397 = vand.u32 %v396, 127
        %vm398 = vcmp.lt.s32.totalorder %v397, 8
        %v399 = vsel %vm398, %v391, 0.0
        %v400 = vsel %vm398, %v394, 0.0
        %v401 = vmul.f32 %v399, %v399
        %v402 = vmul.f32 %v400, %v400
        %vm403 = vcmask 72704
        %v404 = vsel %vm403, %v401, 0.0
        %405 = vadd.xlane.f32.xlu0 %v404
        %v406 = vpop.xlane.xlu0 %405
        %v407 = vsel %vm403, %v402, 0.0
        %408 = vadd.xlane.f32.xlu0 %v407
        %v409 = vpop.xlane.xlu0 %408
        %v410 = vrsqrt.pop %v406
        %v411 = vmul.f32 %v410, %v406
        %v412 = vmul.f32 %v411, %v410
        %v413 = vmul.f32 0.5, %v412
        %v414 = vsub.f32 1.5, %v413
        %v415 = vmul.f32 %v410, %v414
        %v416 = vmul.f32 %v406, %v415
        %vm417 = vcmp.eq.f32.partialorder %v406, inf
        %v418 = vsel %vm417, %v406, %v416
        %vm419 = vcmp.eq.f32.partialorder %v406, 0.0
        %v420 = vand.u32 %v406, 2147483648
        %v421 = vsel %vm419, %v420, %v418
        %v422 = vrsqrt.pop %v409
        %v423 = vmul.f32 %v422, %v409
        %v424 = vmul.f32 %v423, %v422
        %v425 = vmul.f32 0.5, %v424
        %v426 = vsub.f32 1.5, %v425
        %v427 = vmul.f32 %v422, %v426
        %v428 = vmul.f32 %v409, %v427
        %vm429 = vcmp.eq.f32.partialorder %v409, inf
        %v430 = vsel %vm429, %v409, %v428
        %vm431 = vcmp.eq.f32.partialorder %v409, 0.0
        %v432 = vand.u32 %v409, 2147483648
        %v433 = vsel %vm431, %v432, %v430
        %v434 = vadd.f32 %v421, 0.0001
        %v435 = vadd.f32 %v433, 0.0001
        %v436 = vrcp.pop %v434
        %v437 = vmul.f32 %v434, %v436
        %v438 = vsub.f32 1.0, %v437
        %v439 = vmul.f32 %v436, %v438
        %v440 = vadd.f32 %v436, %v439
        %vm441 = vweird.f32 %v434
        %vm442 = vweird.f32 %v436
        %vm443 = vmor %vm441, %vm442
        %v444 = vsel %vm443, %v436, %v440
        %v445 = vand.u32 2147483647, %v434
        %vm446 = vcmp.eq.f32.partialorder %v445, 8.507059e+37
        %v447 = vand.u32 %v434, 2147483648
        %v448 = vor.u32 1.1754944e-38, %v447
        %v449 = vsel %vm446, %v448, %v444
        %v450 = vmul.f32 %v399, %v449
        %v451 = vrcp.pop %v435
        %v452 = vmul.f32 %v435, %v451
        %v453 = vsub.f32 1.0, %v452
        %v454 = vmul.f32 %v451, %v453
        %v455 = vadd.f32 %v451, %v454
        %vm456 = vweird.f32 %v435
        %vm457 = vweird.f32 %v451
        %vm458 = vmor %vm456, %vm457
        %v459 = vsel %vm458, %v451, %v455
        %v460 = vand.u32 2147483647, %v435
        %vm461 = vcmp.eq.f32.partialorder %v460, 8.507059e+37
        %v462 = vand.u32 %v435, 2147483648
        %v463 = vor.u32 1.1754944e-38, %v462
        %v464 = vsel %vm461, %v463, %v459
        %v465 = vmul.f32 %v400, %v464
        %v466 = vand.u32 2147483647, %v391
        %v467 = vand.u32 2147483647, %v394
        %v468 = vsub.f32 0.0, %v466
        %v469 = vsub.f32 0.0, %v467
        %v470 = vmul.f32 %v468, 1.442695
        %v471 = vpow.pop %v470
        %v472 = vmul.f32 %v469, 1.442695
        %v473 = vpow.pop %v472
        %v474 = vadd.f32 %v471, 1.0
        %v475 = vadd.f32 %v473, 1.0
        %v476 = vlog2.pop %v474
        %v477 = vmul.f32 %v476, 0.6931472
        %v478 = vlog2.pop %v475
        %v479 = vmul.f32 %v478, 0.6931472
        %v480 = vmax.f32 %v391, 0.0
        %v481 = vmax.f32 %v394, 0.0
        %v482 = vadd.f32 %v477, %v480
        %v483 = vadd.f32 %v479, %v481
        %v484 = vadd.f32 %v482, 1.0
        %v485 = vadd.f32 %v483, 1.0
        %v486 = vsel %vm398, %v450, %v484
        %v487 = vsel %vm398, %v465, %v485
        %488 = vst.msk [vmem:[%s207] sm:$0xff] %vm403, %v486
        %489 = vst.msk [vmem:[%s207 + $0x8] sm:$0xff] %vm403, %v487
        %p490 = scmp.lt.s32.totalorder %s15, 3
        %s491 = scalar_select %p490, %s15, 3
        %s492 = smul.addr %s491, 2
        %s493 = smul.addr %s492, 8
        %s494 = scalar_lea.vmem %s3, %s493
        // Predicated region
        $region37: #{tpu_custom_call.1} parent=31 // pred_check
          %p495 = pneg %p106
        $region38: #{tpu_custom_call.1} parent=31 // pred_check_branch
          %497 = sbr.rel (%p495) target = $region40
        $region39: #{tpu_custom_call.1} parent=31 // pred_region
          _
        $region40: #{tpu_custom_call.1} parent=31 // pred_fallthru
          _
      $region32: #{tpu_custom_call.1} parent=5 // pred_fallthru
        _
      %p498 = scmp.le.s32.totalorder 2, %s10
      // Predicated region
      $region41: #{tpu_custom_call.1} parent=5 // pred_check
        %p499 = pneg %p498
      $region42: #{tpu_custom_call.1} parent=5 // pred_check_branch
        %501 = sbr.rel (%p499) target = $region44
      $region43: #{tpu_custom_call.1} parent=5 // pred_region
        %s502 = ssub.s32 %s10, 2
        // Predicated region
        $region45: #{tpu_custom_call.1} parent=43 // pred_check
          %p503 = pneg %p112
        $region46: #{tpu_custom_call.1} parent=43 // pred_check_branch
          %505 = sbr.rel (%p503) target = $region48
        $region47: #{tpu_custom_call.1} parent=43 // pred_region
          %p506 = scmp.lt.s32.totalorder %s16, 3
          %s507 = scalar_select %p506, %s16, 3
          %s508 = smul.addr %s507, 2
          %s509 = smul.addr %s508, 8
          %s510 = scalar_lea.vmem %s3, %s509
        $region48: #{tpu_custom_call.1} parent=43 // pred_fallthru
          _
      $region44: #{tpu_custom_call.1} parent=5 // pred_fallthru
        _
    $region6: #{tpu_custom_call.1} parent=1 // loop_footer
      %s14 = sadd.s32 1, %s10
    $region7: #{tpu_custom_call.1} parent=1 // loop_footer_branch
      %9 = sbr.rel target = $region3
    $region8: #{tpu_custom_call.1} parent=1 // loop_exit
      _
    %511 = vsyncpa [#allocation3], 1
    %s512 = scalar_lea.sflag [#allocation3], 1
    %513 = vsyncpa %s512, 1

</llo_original>
